<compile_context>
chip_gen: v7x
topology: tpu7x:2x2x1
jax: 0.10.0
libtpu: 0.0.40
codegen_flags: <defaults>
</compile_context>

<pallas_src>
import math

import jax
import jax.numpy as jnp
from jax.experimental import pallas as pl
from jax.experimental.pallas import tpu as pltpu


# ---------------------------------------------------------------------------
# Small helpers
# ---------------------------------------------------------------------------

def _round_up(x, m):
    return (x + m - 1) // m * m


def _cdiv(a, b):
    return (a + b - 1) // b


def _vmem_budget_bytes():
    """Per-generation usable VMEM budget (~3/4 of physical; 48 MiB fallback)."""
    phys = 64 << 20  # conservative fallback == v7x per-TensorCore VMEM
    try:
        info = pltpu.get_tpu_info()
        phys = int(getattr(info, "vmem_capacity_bytes", phys))
    except Exception:
        pass
    return max(32 << 20, (phys * 3) // 4)


def _vmem_limit(est_bytes, budget):
    return int(min(budget, max(est_bytes + (8 << 20), 32 << 20)))


# ---------------------------------------------------------------------------
# Kernels
# ---------------------------------------------------------------------------

def _support_kernel(x_ref, w_ref, s_ref):
    # support row tile = X_tile @ W, written directly in the aggregation
    # compute dtype (no separate astype pass over HBM).
    s_ref[...] = jnp.dot(
        x_ref[...], w_ref[...], preferred_element_type=jnp.float32
    ).astype(s_ref.dtype)


def _fused_small_kernel(x_ref, adj_ref, w_ref, b_ref, out_ref):
    # Small-problem fast path: whole layer in one unblocked call (f32, exact).
    support = jnp.dot(x_ref[...], w_ref[...], preferred_element_type=jnp.float32)
    out = jnp.dot(adj_ref[...], support, preferred_element_type=jnp.float32)
    out_ref[...] = (out + b_ref[...]).astype(out_ref.dtype)


def _make_aggregate_kernel(*, k_tile, valid_last, resident_support):
    """out row tile = sum_k adj[i, k] @ support[k] + bias (f32 accumulator)."""
    mask_last = valid_last != k_tile  # static: only when N % k_tile != 0

    def kernel(adj_ref, s_ref, b_ref, out_ref, acc_ref):
        k = pl.program_id(1)
        nk = pl.num_programs(1)

        @pl.when(k == 0)
        def _():
            acc_ref[...] = jnp.zeros_like(acc_ref)

        adj_blk = adj_ref[...]
        if mask_last:
            # Edge-mask the block-padding garbage columns of the last K tile
            # (support rows in the padded K range are exact zeros already).
            limit = jnp.where(k == nk - 1, valid_last, k_tile)
            col = jax.lax.broadcasted_iota(jnp.int32, adj_blk.shape, 1)
            adj_blk = jnp.where(col < limit, adj_blk, jnp.zeros_like(adj_blk))

        if resident_support:
            # Whole support matrix is VMEM-resident; slice the current K tile.
            start = pl.multiple_of(k * k_tile, k_tile)
            s_blk = s_ref[pl.ds(start, k_tile), :]
        else:
            s_blk = s_ref[...]

        acc_ref[...] += jnp.dot(adj_blk, s_blk, preferred_element_type=jnp.float32)

        @pl.when(k == nk - 1)
        def _():
            # Bias add fused into the single final store of the output tile.
            out_ref[...] = (acc_ref[...] + b_ref[...]).astype(out_ref.dtype)

    return kernel


# ---------------------------------------------------------------------------
# Wrapper
# ---------------------------------------------------------------------------

def graph_convolution(x, adj, weight, bias=None, *,
                      compute_dtype=jnp.bfloat16,
                      row_tile=None, k_tile=None,
                      support_resident=None,
                      force_tiled=False):
    """Pallas GCN forward: adj @ (x @ weight) + bias.

    x:[N,Fin], adj:[N,N], weight:[Fin,Fout], bias:[Fout] -> [N,Fout] float32.

    compute_dtype: dtype of the adj/support operands in the aggregation matmul
      (accumulation is always f32 in VMEM). Default bf16 (halves the dominant
      N*N HBM stream, ~3x MXU rate); pass jnp.float32 for exact f32. If the
      caller already holds adj in this dtype, no extra cast pass is issued.
    support_resident: None=auto, True/False force keeping the whole support
      matrix resident in VMEM during aggregation.
    """
    n, fin = x.shape
    fout = weight.shape[1]
    out_dtype = jnp.float32

    if compute_dtype is None:
        compute_dtype = jnp.float32
    compute_dtype = jnp.dtype(compute_dtype)
    op_bytes = compute_dtype.itemsize

    if bias is None:
        bias = jnp.zeros((fout,), dtype=jnp.float32)

    budget = _vmem_budget_bytes()

    # Lane-dense output: pad Fout to a multiple of 128 (zero weight/bias cols,
    # sliced off below) so output stores are unmasked and the MXU N-dim is full.
    fout_p = _round_up(fout, 128)
    weight_p = weight.astype(jnp.float32)
    bias_p = bias.astype(jnp.float32)
    if fout_p != fout:
        weight_p = jnp.pad(weight_p, ((0, 0), (0, fout_p - fout)))
        bias_p = jnp.pad(bias_p, (0, fout_p - fout))
    bias2d = bias_p.reshape(1, fout_p)

    # ---------------- tiny-problem fast path: one fused unblocked call -------
    fused_resident = 4 * (n * n + n * fin + fin * fout_p + n * fout_p + fout_p)
    if (not force_tiled) and fused_resident <= (4 << 20):
        out = pl.pallas_call(
            _fused_small_kernel,
            out_shape=jax.ShapeDtypeStruct((n, fout_p), out_dtype),
            grid_spec=pltpu.PrefetchScalarGridSpec(
                num_scalar_prefetch=0,
                grid=(1,),
                in_specs=[
                    pl.BlockSpec((n, fin), lambda i: (0, 0)),        # x (full)
                    pl.BlockSpec((n, n), lambda i: (0, 0)),          # adj (full)
                    pl.BlockSpec((fin, fout_p), lambda i: (0, 0)),   # weight
                    pl.BlockSpec((1, fout_p), lambda i: (0, 0)),     # bias
                ],
                out_specs=pl.BlockSpec((n, fout_p), lambda i: (0, 0)),
            ),
            compiler_params=pltpu.CompilerParams(
                dimension_semantics=("arbitrary",),
                vmem_limit_bytes=_vmem_limit(2 * fused_resident, budget),
            ),
        )(x, adj, weight_p, bias2d)
        return out[:, :fout] if fout_p != fout else out

    # ---------------- tiled path ----------------------------------------------
    # Sublane packing of the aggregation operands: f32 -> 8, bf16 -> 16, int8 -> 32.
    sub = max(8, 32 // max(op_bytes, 1))

    # K tile (lane dim of the adj block / sublane dim of the support tile).
    if k_tile is None:
        k_tile = 2048 if op_bytes <= 2 else 1024
    k_tile = max(128, (min(k_tile, _round_up(n, 128)) // 128) * 128)

    # Row tile (sublane dim of adj/out blocks). Default keeps >= 2 row blocks
    # so the "parallel" row axis can shard across v7x's two TensorCores.
    if row_tile is None:
        row_tile = 1024
        if row_tile >= n:
            row_tile = _round_up(max(_cdiv(n, 2), sub), sub)
    row_tile = max(sub, (min(row_tile, _round_up(n, sub)) // sub) * sub)

    n_pad = _round_up(n, k_tile)

    resident = support_resident
    if resident is None:
        resident = (2 * n_pad * fout_p * op_bytes) <= budget // 3

    def _s2_bytes(rt, kt, res, npad):
        b = 2 * rt * kt * op_bytes          # adj tiles (double-buffered)
        b += 2 * rt * fout_p * 4            # output tiles
        b += rt * fout_p * 4                # f32 accumulator
        b += 2 * fout_p * 4                 # bias
        if res:
            b += 2 * npad * fout_p * op_bytes   # resident support
        else:
            b += 2 * kt * fout_p * op_bytes     # streamed support K tiles
        return b

    # Shrink tiles until the stage-2 working set fits the per-gen VMEM budget.
    while _s2_bytes(row_tile, k_tile, resident, n_pad) > budget:
        if k_tile > 128 and k_tile >= row_tile:
            k_tile //= 2
            n_pad = _round_up(n, k_tile)
        elif row_tile > sub:
            row_tile = max(sub, (row_tile // 2 // sub) * sub)
        elif resident and support_resident is None:
            resident = False
        elif k_tile > 128:
            k_tile //= 2
            n_pad = _round_up(n, k_tile)
        else:
            break

    rem = n % k_tile
    valid_last = rem if rem else k_tile

    # ---- Stage 1: support = X @ W (computed once, emitted in compute dtype) --
    # Zero-pad X rows to n_pad so support rows in [n, n_pad) are exact zeros.
    x_pad = x if n_pad == n else jnp.pad(x, ((0, n_pad - n), (0, 0)))
    x_bytes = jnp.dtype(x.dtype).itemsize

    rt1 = max(sub, (min(1024, n_pad) // sub) * sub)

    def _s1_bytes(rt):
        return (2 * rt * fin * x_bytes + 2 * fin * fout_p * 4
                + 2 * rt * fout_p * op_bytes)

    while _s1_bytes(rt1) > budget and rt1 > sub:
        rt1 = max(sub, (rt1 // 2 // sub) * sub)
    # TODO(synk): also K-tile over Fin if Fin*Fout_p alone ever overflows VMEM.

    support = pl.pallas_call(
        _support_kernel,
        out_shape=jax.ShapeDtypeStruct((n_pad, fout_p), compute_dtype),
        grid_spec=pltpu.PrefetchScalarGridSpec(
            num_scalar_prefetch=0,
            grid=(_cdiv(n_pad, rt1),),
            in_specs=[
                pl.BlockSpec((rt1, fin), lambda i: (i, 0)),       # x row tile
                pl.BlockSpec((fin, fout_p), lambda i: (0, 0)),    # weight
            ],
            out_specs=pl.BlockSpec((rt1, fout_p), lambda i: (i, 0)),
        ),
        compiler_params=pltpu.CompilerParams(
            dimension_semantics=("parallel",),
            vmem_limit_bytes=_vmem_limit(_s1_bytes(rt1), budget),
        ),
    )(x_pad, weight_p)

    # ---- Stage 2: out = adj @ support + bias, (row, K)-tiled, f32 accumulator
    # Cast adj once only if the caller did not already supply compute dtype.
    adj_c = adj if adj.dtype == compute_dtype else adj.astype(compute_dtype)

    if resident:
        support_spec = pl.BlockSpec((n_pad, fout_p), lambda i, k: (0, 0))
    else:
        support_spec = pl.BlockSpec((k_tile, fout_p), lambda i, k: (k, 0))

    agg_kernel = _make_aggregate_kernel(
        k_tile=k_tile, valid_last=valid_last, resident_support=resident)

    grid = (_cdiv(n, row_tile), n_pad // k_tile)
    out = pl.pallas_call(
        agg_kernel,
        out_shape=jax.ShapeDtypeStruct((n, fout_p), out_dtype),
        grid_spec=pltpu.PrefetchScalarGridSpec(
            num_scalar_prefetch=0,
            grid=grid,
            in_specs=[
                pl.BlockSpec((row_tile, k_tile), lambda i, k: (i, k)),  # adj
                support_spec,                                           # support
                pl.BlockSpec((1, fout_p), lambda i, k: (0, 0)),         # bias
            ],
            out_specs=pl.BlockSpec((row_tile, fout_p), lambda i, k: (i, 0)),
            scratch_shapes=[pltpu.VMEM((row_tile, fout_p), jnp.float32)],
        ),
        compiler_params=pltpu.CompilerParams(
            dimension_semantics=("parallel", "arbitrary"),
            vmem_limit_bytes=_vmem_limit(
                _s2_bytes(row_tile, k_tile, resident, n_pad), budget),
        ),
    )(adj_c, support, bias2d)

    return out[:, :fout] if fout_p != fout else out


def reference(x, adj, weight, bias):
    return adj @ (x @ weight) + bias[None, :]


# ---------------------------------------------------------------------------
# Test
# ---------------------------------------------------------------------------

def _make_problem(key, n, fin, fout):
    k_x, k_adj, k_w, k_b = jax.random.split(key, 4)
    x = jax.random.normal(k_x, (n, fin), dtype=jnp.float32)
    raw = jax.random.uniform(k_adj, (n, n), dtype=jnp.float32)
    adj = jnp.where(raw > 0.9, 1.0, 0.0)
    adj = jnp.maximum(adj, adj.T) + jnp.eye(n, dtype=jnp.float32)
    adj = adj / jnp.sum(adj, axis=1, keepdims=True)       # row-normalized
    stdv = 1.0 / math.sqrt(fout)                           # reset_parameters()
    w = jax.random.uniform(k_w, (fin, fout), dtype=jnp.float32,
                           minval=-stdv, maxval=stdv)
    b = jax.random.uniform(k_b, (fout,), dtype=jnp.float32,
                           minval=-stdv, maxval=stdv)
    return x, adj, w, b


if __name__ == "__main__":
    key = jax.random.PRNGKey(0)
    k1, k2 = jax.random.split(key, 2)

    # Small shapes: N nodes = 256, in_features = 64, out_features = 32
    N, FIN, FOUT = 256, 64, 32
    x, adj, w, b = _make_problem(k1, N, FIN, FOUT)
    ref = reference(x, adj, w, b)

    # Path 1: default small problem -> single fused unblocked f32 call.
    out_fused = jax.block_until_ready(graph_convolution(x, adj, w, b))
    assert out_fused.shape == (N, FOUT)
    assert jnp.allclose(out_fused, ref, atol=1e-4, rtol=1e-4), \
        "fused path mismatch vs reference"

    # Path 2: tiled f32 path (hoisted X@W + K-tiled accumulation), streamed
    # support, forced at small shapes to exercise the production kernels.
    out_t32 = jax.block_until_ready(
        graph_convolution(x, adj, w, b, compute_dtype=jnp.float32,
                          row_tile=128, k_tile=128, support_resident=False,
                          force_tiled=True))
    assert out_t32.shape == (N, FOUT)
    assert jnp.allclose(out_t32, ref, atol=1e-4, rtol=1e-4), \
        "tiled f32 path mismatch vs reference"

    # Path 3: default tiled path (bf16 operands, f32 accumulation, resident
    # support when it fits). Looser tolerance for bf16 operands.
    out_tbf = jax.block_until_ready(
        graph_convolution(x, adj, w, b, force_tiled=True))
    assert out_tbf.shape == (N, FOUT)
    assert jnp.allclose(out_tbf, ref, atol=2e-2, rtol=2e-2), \
        "tiled bf16 path mismatch vs reference"

    # Path 4: non-dividing N exercises the in-kernel K-edge masking, in both
    # streamed and resident support modes (exact f32).
    N2 = 200
    x2, adj2, w2, b2 = _make_problem(k2, N2, FIN, FOUT)
    ref2 = reference(x2, adj2, w2, b2)
    out_mask_s = jax.block_until_ready(
        graph_convolution(x2, adj2, w2, b2, compute_dtype=jnp.float32,
                          row_tile=64, k_tile=128, support_resident=False,
                          force_tiled=True))
    out_mask_r = jax.block_until_ready(
        graph_convolution(x2, adj2, w2, b2, compute_dtype=jnp.float32,
                          row_tile=64, k_tile=128, support_resident=True,
                          force_tiled=True))
    assert out_mask_s.shape == (N2, FOUT) and out_mask_r.shape == (N2, FOUT)
    assert jnp.allclose(out_mask_s, ref2, atol=1e-4, rtol=1e-4), \
        "masked (streamed) path mismatch vs reference"
    assert jnp.allclose(out_mask_r, ref2, atol=1e-4, rtol=1e-4), \
        "masked (resident) path mismatch vs reference"

    print("KERNEL_OK")
</pallas_src>

<mosaic_0001>
module attributes {stable_mosaic.version = 11 : i64} {
  func.func @_fused_small_kernel(%arg0: i32, %arg1: memref<256x64xf32, #tpu.memory_space<vmem>>, %arg2: memref<256x256xf32, #tpu.memory_space<vmem>>, %arg3: memref<64x128xf32, #tpu.memory_space<vmem>>, %arg4: memref<1x128xf32, #tpu.memory_space<vmem>>, %arg5: memref<256x128xf32, #tpu.memory_space<vmem>>) attributes {dimension_semantics = [#tpu.dimension_semantics<arbitrary>], iteration_bounds = array<i64: 1>, scalar_prefetch = 0 : i64, scratch_operands = 0 : i64, tpu.core_type = #tpu.core_type<tc>, window_params = [{pipeline_mode = #tpu.pipeline_mode<synchronous>, transform_indices = @transform_0, window_bounds = array<i64: 256, 64>}, {pipeline_mode = #tpu.pipeline_mode<synchronous>, transform_indices = @transform_1, window_bounds = array<i64: 256, 256>}, {pipeline_mode = #tpu.pipeline_mode<synchronous>, transform_indices = @transform_2, window_bounds = array<i64: 64, 128>}, {pipeline_mode = #tpu.pipeline_mode<synchronous>, transform_indices = @transform_3, window_bounds = array<i64: 1, 128>}, {pipeline_mode = #tpu.pipeline_mode<synchronous>, transform_indices = @transform_4, window_bounds = array<i64: 256, 128>}]} {
    %c0 = arith.constant 0 : index
    %c0_0 = arith.constant 0 : index
    %0 = vector.load %arg1[%c0, %c0_0] : memref<256x64xf32, #tpu.memory_space<vmem>>, vector<256x64xf32>
    %c0_1 = arith.constant 0 : index
    %c0_2 = arith.constant 0 : index
    %1 = vector.load %arg3[%c0_1, %c0_2] : memref<64x128xf32, #tpu.memory_space<vmem>>, vector<64x128xf32>
    %cst = arith.constant dense<0.000000e+00> : vector<256x128xf32>
    %2 = tpu.matmul %0, %1, %cst {dimension_numbers = #tpu.dot_dimension_numbers<[1], [0], [0], [1], [0, 0, 1, 1], [], []>} : vector<256x64xf32>, vector<64x128xf32>, vector<256x128xf32> -> vector<256x128xf32>
    %c0_3 = arith.constant 0 : index
    %c0_4 = arith.constant 0 : index
    %3 = vector.load %arg2[%c0_3, %c0_4] : memref<256x256xf32, #tpu.memory_space<vmem>>, vector<256x256xf32>
    %cst_5 = arith.constant dense<0.000000e+00> : vector<256x128xf32>
    %4 = tpu.matmul %3, %2, %cst_5 {dimension_numbers = #tpu.dot_dimension_numbers<[1], [0], [0], [1], [0, 0, 1, 1], [], []>} : vector<256x256xf32>, vector<256x128xf32>, vector<256x128xf32> -> vector<256x128xf32>
    %c0_6 = arith.constant 0 : index
    %c0_7 = arith.constant 0 : index
    %5 = vector.load %arg4[%c0_6, %c0_7] : memref<1x128xf32, #tpu.memory_space<vmem>>, vector<1x128xf32>
    %6 = vector.broadcast %5 : vector<1x128xf32> to vector<256x128xf32>
    %7 = arith.addf %4, %6 : vector<256x128xf32>
    %c0_8 = arith.constant 0 : index
    %c0_9 = arith.constant 0 : index
    %8 = vector.load %arg5[%c0_8, %c0_9] : memref<256x128xf32, #tpu.memory_space<vmem>>, vector<256x128xf32>
    tpu.vector_store %arg5[%c0_8, %c0_9], %7 {strides = array<i32>} : memref<256x128xf32, #tpu.memory_space<vmem>>, vector<256x128xf32>,
    return
  }
  func.func @transform_0(%arg0: i32) -> (i32, i32) {
    %c0_i32 = arith.constant 0 : i32
    %c0_i32_0 = arith.constant 0 : i32
    %c0_i32_1 = arith.constant 0 : i32
    return %c0_i32, %c0_i32_0 : i32, i32
  }
  func.func @transform_1(%arg0: i32) -> (i32, i32) {
    %c0_i32 = arith.constant 0 : i32
    %c0_i32_0 = arith.constant 0 : i32
    %c0_i32_1 = arith.constant 0 : i32
    return %c0_i32, %c0_i32_0 : i32, i32
  }
  func.func @transform_2(%arg0: i32) -> (i32, i32) {
    %c0_i32 = arith.constant 0 : i32
    %c0_i32_0 = arith.constant 0 : i32
    %c0_i32_1 = arith.constant 0 : i32
    return %c0_i32, %c0_i32_0 : i32, i32
  }
  func.func @transform_3(%arg0: i32) -> (i32, i32) {
    %c0_i32 = arith.constant 0 : i32
    %c0_i32_0 = arith.constant 0 : i32
    %c0_i32_1 = arith.constant 0 : i32
    return %c0_i32, %c0_i32_0 : i32, i32
  }
  func.func @transform_4(%arg0: i32) -> (i32, i32) {
    %c0_i32 = arith.constant 0 : i32
    %c0_i32_0 = arith.constant 0 : i32
    %c0_i32_1 = arith.constant 0 : i32
    return %c0_i32, %c0_i32_0 : i32, i32
  }
}

</mosaic_0001>

<llo_original>
// kernel: tpu_custom_call.1
$region0: #{tpu_custom_call.1}
  #allocation0 [shape = 'u32[]', space=smem, size = 0x4, offset = 0x4, fixed_abs, tag = 'smem constant byte address 0x4 - core index']
  #allocation1 [shape = 'u32[144,128]{1,0:T(1,128)}', space=vmem, size = 0x12000, scoped, tag = 'internal scratch']
  %s0 = inlined_call_operand.vmem [shape: f32[256,64], index: 0, kind: input, shape index: {}]
  %s1 = inlined_call_operand.hbm [shape: f32[256,256], index: 1, kind: input, shape index: {}]
  %s2 = inlined_call_operand.vmem [shape: f32[64,128], index: 2, kind: input, shape index: {}]
  %s3 = inlined_call_operand.vmem [shape: f32[1,128], index: 3, kind: input, shape index: {}]
  %s4 = inlined_call_operand.hbm [shape: f32[256,128], index: 4, kind: output, shape index: {}]
  %s5 = sld [smem:[#allocation0]]
  $region30: #{tpu_custom_call.1} parent=0
    _
  %s7 = ssub.s32 1, %s5
  %s8 = scalar_select 0, %s7, %s5
  $region1: #{tpu_custom_call.1} parent=0
    #allocation2 [shape = 'u8[262144]{0}', space=vmem, size = 0x40000, scoped, tag = 'input window, operand 1, single buffered']
    #allocation3 [shape = 's32[1]{0}', space=sflag, size = 0x4, scoped, tag = 'scoped memory for tpu_custom_call.1']
    #allocation4 [shape = 's32[1]{0}', space=sflag, size = 0x4, scoped, tag = 'scoped memory for tpu_custom_call.1']
    #allocation5 [shape = 'u8[131072]{0}', space=vmem, size = 0x20000, scoped, tag = 'output window, operand 0, single buffered']
    %9 = vsyncpa [#allocation3], 0
    %10 = vsyncpa [#allocation4], 0
    // Predicated region
    $region2: #{tpu_custom_call.1} parent=1 // pred_check
      _
    $region3: #{tpu_custom_call.1} parent=1 // pred_check_branch
      %12 = sbr.rel (0) target = $region5
    $region4: #{tpu_custom_call.1} parent=1 // pred_region
      _
    $region5: #{tpu_custom_call.1} parent=1 // pred_fallthru
      _
    // Predicated region
    $region6: #{tpu_custom_call.1} parent=1 // pred_check
      _
    $region7: #{tpu_custom_call.1} parent=1 // pred_check_branch
      %14 = sbr.rel (0) target = $region9
    $region8: #{tpu_custom_call.1} parent=1 // pred_region
      %s16 = ssub.s32 8192, 8192
      %17 = vsyncadd [#allocation3], %s16
      %s18 = sshll.u32 [#allocation2], 4
      %s19 = int_to_ptr.vmem [resolvable:$true] %s18
      %24 = dma.hbm_to_vmem [thread:$0]  %s1, 8192, %s19, [#allocation3], 256, 256, 16
    $region9: #{tpu_custom_call.1} parent=1 // pred_fallthru
      _
    // Predicated region
    $region10: #{tpu_custom_call.1} parent=1 // pred_check
      _
    $region11: #{tpu_custom_call.1} parent=1 // pred_check_branch
      %26 = sbr.rel (0) target = $region13
    $region12: #{tpu_custom_call.1} parent=1 // pred_region
      _
    $region13: #{tpu_custom_call.1} parent=1 // pred_fallthru
      _
    // Predicated region
    $region14: #{tpu_custom_call.1} parent=1 // pred_check
      _
    $region15: #{tpu_custom_call.1} parent=1 // pred_check_branch
      %28 = sbr.rel (0) target = $region17
    $region16: #{tpu_custom_call.1} parent=1 // pred_region
      _
    $region17: #{tpu_custom_call.1} parent=1 // pred_fallthru
      _
    // Predicated region
    $region18: #{tpu_custom_call.1} parent=1 // pred_check
      _
    $region19: #{tpu_custom_call.1} parent=1 // pred_check_branch
      %30 = sbr.rel (0) target = $region21
    $region20: #{tpu_custom_call.1} parent=1 // pred_region
      %31 = dma.done [#allocation3], 8192
    $region21: #{tpu_custom_call.1} parent=1 // pred_fallthru
      _
    %v32 = vld [vmem:[%s0] sm:$0xff]
    %v33 = vld [vmem:[%s0 + $0x8] sm:$0xff]
    %v34 = vld [vmem:[%s0 + $0x10] sm:$0xff]
    %v35 = vld [vmem:[%s0 + $0x18] sm:$0xff]
    %v36 = vld [vmem:[%s0 + $0x20] sm:$0xff]
    %v37 = vld [vmem:[%s0 + $0x28] sm:$0xff]
    %v38 = vld [vmem:[%s0 + $0x30] sm:$0xff]
    %v39 = vld [vmem:[%s0 + $0x38] sm:$0xff]
    %v40 = vld [vmem:[%s0 + $0x40] sm:$0xff]
    %v41 = vld [vmem:[%s0 + $0x48] sm:$0xff]
    %v42 = vld [vmem:[%s0 + $0x50] sm:$0xff]
    %v43 = vld [vmem:[%s0 + $0x58] sm:$0xff]
    %v44 = vld [vmem:[%s0 + $0x60] sm:$0xff]
    %v45 = vld [vmem:[%s0 + $0x68] sm:$0xff]
    %v46 = vld [vmem:[%s0 + $0x70] sm:$0xff]
    %v47 = vld [vmem:[%s0 + $0x78] sm:$0xff]
    %v48 = vld [vmem:[%s0 + $0x80] sm:$0xff]
    %v49 = vld [vmem:[%s0 + $0x88] sm:$0xff]
    %v50 = vld [vmem:[%s0 + $0x90] sm:$0xff]
    %v51 = vld [vmem:[%s0 + $0x98] sm:$0xff]
    %v52 = vld [vmem:[%s0 + $0xa0] sm:$0xff]
    %v53 = vld [vmem:[%s0 + $0xa8] sm:$0xff]
    %v54 = vld [vmem:[%s0 + $0xb0] sm:$0xff]
    %v55 = vld [vmem:[%s0 + $0xb8] sm:$0xff]
    %v56 = vld [vmem:[%s0 + $0xc0] sm:$0xff]
    %v57 = vld [vmem:[%s0 + $0xc8] sm:$0xff]
    %v58 = vld [vmem:[%s0 + $0xd0] sm:$0xff]
    %v59 = vld [vmem:[%s0 + $0xd8] sm:$0xff]
    %v60 = vld [vmem:[%s0 + $0xe0] sm:$0xff]
    %v61 = vld [vmem:[%s0 + $0xe8] sm:$0xff]
    %v62 = vld [vmem:[%s0 + $0xf0] sm:$0xff]
    %v63 = vld [vmem:[%s0 + $0xf8] sm:$0xff]
    %v64 = vld [vmem:[%s2] sm:$0xff]
    %v65 = vld [vmem:[%s2 + $0x8] sm:$0xff]
    %v66 = vld [vmem:[%s2 + $0x10] sm:$0xff]
    %v67 = vld [vmem:[%s2 + $0x18] sm:$0xff]
    %v68 = vld [vmem:[%s2 + $0x20] sm:$0xff]
    %v69 = vld [vmem:[%s2 + $0x28] sm:$0xff]
    %v70 = vld [vmem:[%s2 + $0x30] sm:$0xff]
    %v71 = vld [vmem:[%s2 + $0x38] sm:$0xff]
    %vm72 = vcmask 523264
    %v74 = vsel %vm72, %v32, 0
    %v77 = vsel %vm72, %v33, 0
    %v80 = vsel %vm72, %v34, 0
    %v83 = vsel %vm72, %v35, 0
    %v86 = vsel %vm72, %v36, 0
    %v89 = vsel %vm72, %v37, 0
    %v92 = vsel %vm72, %v38, 0
    %v95 = vsel %vm72, %v39, 0
    %v98 = vsel %vm72, %v40, 0
    %v101 = vsel %vm72, %v41, 0
    %v104 = vsel %vm72, %v42, 0
    %v107 = vsel %vm72, %v43, 0
    %v110 = vsel %vm72, %v44, 0
    %v113 = vsel %vm72, %v45, 0
    %v116 = vsel %vm72, %v46, 0
    %v119 = vsel %vm72, %v47, 0
    %v122 = vsel %vm72, %v48, 0
    %v125 = vsel %vm72, %v49, 0
    %v128 = vsel %vm72, %v50, 0
    %v131 = vsel %vm72, %v51, 0
    %v134 = vsel %vm72, %v52, 0
    %v137 = vsel %vm72, %v53, 0
    %v140 = vsel %vm72, %v54, 0
    %v143 = vsel %vm72, %v55, 0
    %v146 = vsel %vm72, %v56, 0
    %v149 = vsel %vm72, %v57, 0
    %v152 = vsel %vm72, %v58, 0
    %v155 = vsel %vm72, %v59, 0
    %v158 = vsel %vm72, %v60, 0
    %v161 = vsel %vm72, %v61, 0
    %v164 = vsel %vm72, %v62, 0
    %v167 = vsel %vm72, %v63, 0
    %169 = vmatprep.subr.mxu0 0.0
    %170 = vmatpush1.msra.mxu0 %v64
    %171 = vmatprep.subr.mxu0 0.0
    %172 = vmatpush1.msra.mxu0 %v65
    %173 = vmatprep.subr.mxu0 0.0
    %174 = vmatpush1.msra.mxu0 %v66
    %175 = vmatprep.subr.mxu0 0.0
    %176 = vmatpush1.msra.mxu0 %v67
    %177 = vmatprep.subr.mxu0 0.0
    %178 = vmatpush1.msra.mxu0 %v68
    %179 = vmatprep.subr.mxu0 0.0
    %180 = vmatpush1.msra.mxu0 %v69
    %181 = vmatprep.subr.mxu0 0.0
    %182 = vmatpush1.msra.mxu0 %v70
    %183 = vmatprep.subr.mxu0 0.0
    %184 = vmatpush1.msra.mxu0 %v71
    %185 = vmatprep.subr.mxu0 0.0
    %186 = vmatpush1.msra.mxu0 0.0
    %187 = vmatprep.subr.mxu0 0.0
    %188 = vmatpush1.msra.mxu0 0.0
    %189 = vmatprep.subr.mxu0 0.0
    %190 = vmatpush1.msra.mxu0 0.0
    %191 = vmatprep.subr.mxu0 0.0
    %192 = vmatpush1.msra.mxu0 0.0
    %193 = vmatprep.subr.mxu0 0.0
    %194 = vmatpush1.msra.mxu0 0.0
    %195 = vmatprep.subr.mxu0 0.0
    %196 = vmatpush1.msra.mxu0 0.0
    %197 = vmatprep.subr.mxu0 0.0
    %198 = vmatpush1.msra.mxu0 0.0
    %199 = vmatprep.subr.mxu0 0.0
    %200 = vmatpush1.msra.mxu0 0.0
    %201 = vmatprep.subr.mxu0 0.0
    %202 = vmatpush1.msra.mxu0 0.0
    %203 = vmatprep.subr.mxu0 0.0
    %204 = vmatpush1.msra.mxu0 0.0
    %205 = vmatprep.subr.mxu0 0.0
    %206 = vmatpush1.msra.mxu0 0.0
    %207 = vmatprep.subr.mxu0 0.0
    %208 = vmatpush1.msra.mxu0 0.0
    %209 = vmatprep.subr.mxu0 0.0
    %210 = vmatpush1.msra.mxu0 0.0
    %211 = vmatprep.subr.mxu0 0.0
    %212 = vmatpush1.msra.mxu0 0.0
    %213 = vmatprep.subr.mxu0 0.0
    %214 = vmatpush1.msra.mxu0 0.0
    %215 = vmatprep.subr.mxu0 0.0
    %216 = vmatpush1.msra.mxu0 0.0
    %217 = vmatprep.subr.mxu0 0.0
    %218 = vmatpush1.msra.mxu0 0.0
    %219 = vmatprep.subr.mxu0 0.0
    %220 = vmatpush1.msra.mxu0 0.0
    %221 = vmatprep.subr.mxu0 0.0
    %222 = vmatpush1.msra.mxu0 0.0
    %223 = vmatprep.subr.mxu0 0.0
    %224 = vmatpush1.msra.mxu0 0.0
    %225 = vmatprep.subr.mxu0 0.0
    %226 = vmatpush1.msra.mxu0 0.0
    %227 = vmatprep.subr.mxu0 0.0
    %228 = vmatpush1.msra.mxu0 0.0
    %229 = vmatprep.subr.mxu0 0.0
    %230 = vmatpush1.msra.mxu0 0.0
    %231 = vmatprep.subr.mxu0 0.0
    %232 = vmatpush1.msra.mxu0 0.0
    %233 = vmatprep.mubr.f32.mxu0 0.0
    %234 = vmatmul.mubr.f32.gmra.mrb[0].mxu0 %v74
    %v235 = vpop.f32.mrb[0].mxu0
    %v236 = vadd.f32 0.0, %v235
    %v237 = vpop.f32.mrb[0].mxu0
    %238 = vmatprep.mubr.f32.mxu0 0.0
    %239 = vmatmul.mubr.f32.gmra.mrb[0].mxu0 %v77
    %v240 = vpop.f32.mrb[0].mxu0
    %v241 = vadd.f32 0.0, %v240
    %v242 = vpop.f32.mrb[0].mxu0
    %243 = vmatprep.mubr.f32.mxu0 0.0
    %244 = vmatmul.mubr.f32.gmra.mrb[0].mxu0 %v80
    %v245 = vpop.f32.mrb[0].mxu0
    %v246 = vadd.f32 0.0, %v245
    %v247 = vpop.f32.mrb[0].mxu0
    %248 = vmatprep.mubr.f32.mxu0 0.0
    %249 = vmatmul.mubr.f32.gmra.mrb[0].mxu0 %v83
    %v250 = vpop.f32.mrb[0].mxu0
    %v251 = vadd.f32 0.0, %v250
    %v252 = vpop.f32.mrb[0].mxu0
    %253 = vmatprep.mubr.f32.mxu0 0.0
    %254 = vmatmul.mubr.f32.gmra.mrb[0].mxu0 %v86
    %v255 = vpop.f32.mrb[0].mxu0
    %v256 = vadd.f32 0.0, %v255
    %v257 = vpop.f32.mrb[0].mxu0
    %258 = vmatprep.mubr.f32.mxu0 0.0
    %259 = vmatmul.mubr.f32.gmra.mrb[0].mxu0 %v89
    %v260 = vpop.f32.mrb[0].mxu0
    %v261 = vadd.f32 0.0, %v260
    %v262 = vpop.f32.mrb[0].mxu0
    %263 = vmatprep.mubr.f32.mxu0 0.0
    %264 = vmatmul.mubr.f32.gmra.mrb[0].mxu0 %v92
    %v265 = vpop.f32.mrb[0].mxu0
    %v266 = vadd.f32 0.0, %v265
    %v267 = vpop.f32.mrb[0].mxu0
    %268 = vmatprep.mubr.f32.mxu0 0.0
    %269 = vmatmul.mubr.f32.gmra.mrb[0].mxu0 %v95
    %v270 = vpop.f32.mrb[0].mxu0
    %v271 = vadd.f32 0.0, %v270
    %v272 = vpop.f32.mrb[0].mxu0
    %273 = vmatprep.mubr.f32.mxu0 0.0
    %274 = vmatmul.mubr.f32.gmra.mrb[0].mxu0 %v98
    %v275 = vpop.f32.mrb[0].mxu0
    %v276 = vadd.f32 0.0, %v275
    %v277 = vpop.f32.mrb[0].mxu0
    %278 = vmatprep.mubr.f32.mxu0 0.0
    %279 = vmatmul.mubr.f32.gmra.mrb[0].mxu0 %v101
    %v280 = vpop.f32.mrb[0].mxu0
    %v281 = vadd.f32 0.0, %v280
    %v282 = vpop.f32.mrb[0].mxu0
    %283 = vmatprep.mubr.f32.mxu0 0.0
    %284 = vmatmul.mubr.f32.gmra.mrb[0].mxu0 %v104
    %v285 = vpop.f32.mrb[0].mxu0
    %v286 = vadd.f32 0.0, %v285
    %v287 = vpop.f32.mrb[0].mxu0
    %288 = vmatprep.mubr.f32.mxu0 0.0
    %289 = vmatmul.mubr.f32.gmra.mrb[0].mxu0 %v107
    %v290 = vpop.f32.mrb[0].mxu0
    %v291 = vadd.f32 0.0, %v290
    %v292 = vpop.f32.mrb[0].mxu0
    %293 = vmatprep.mubr.f32.mxu0 0.0
    %294 = vmatmul.mubr.f32.gmra.mrb[0].mxu0 %v110
    %v295 = vpop.f32.mrb[0].mxu0
    %v296 = vadd.f32 0.0, %v295
    %v297 = vpop.f32.mrb[0].mxu0
    %298 = vmatprep.mubr.f32.mxu0 0.0
    %299 = vmatmul.mubr.f32.gmra.mrb[0].mxu0 %v113
    %v300 = vpop.f32.mrb[0].mxu0
    %v301 = vadd.f32 0.0, %v300
    %v302 = vpop.f32.mrb[0].mxu0
    %303 = vmatprep.mubr.f32.mxu0 0.0
    %304 = vmatmul.mubr.f32.gmra.mrb[0].mxu0 %v116
    %v305 = vpop.f32.mrb[0].mxu0
    %v306 = vadd.f32 0.0, %v305
    %v307 = vpop.f32.mrb[0].mxu0
    %308 = vmatprep.mubr.f32.mxu0 0.0
    %309 = vmatmul.mubr.f32.gmra.mrb[0].mxu0 %v119
    %v310 = vpop.f32.mrb[0].mxu0
    %v311 = vadd.f32 0.0, %v310
    %v312 = vpop.f32.mrb[0].mxu0
    %313 = vmatprep.mubr.f32.mxu0 0.0
    %314 = vmatmul.mubr.f32.gmra.mrb[0].mxu0 %v122
    %v315 = vpop.f32.mrb[0].mxu0
    %v316 = vadd.f32 0.0, %v315
    %v317 = vpop.f32.mrb[0].mxu0
    %318 = vmatprep.mubr.f32.mxu0 0.0
    %319 = vmatmul.mubr.f32.gmra.mrb[0].mxu0 %v125
    %v320 = vpop.f32.mrb[0].mxu0
    %v321 = vadd.f32 0.0, %v320
    %v322 = vpop.f32.mrb[0].mxu0
    %323 = vmatprep.mubr.f32.mxu0 0.0
    %324 = vmatmul.mubr.f32.gmra.mrb[0].mxu0 %v128
    %v325 = vpop.f32.mrb[0].mxu0
    %v326 = vadd.f32 0.0, %v325
    %v327 = vpop.f32.mrb[0].mxu0
    %328 = vmatprep.mubr.f32.mxu0 0.0
    %329 = vmatmul.mubr.f32.gmra.mrb[0].mxu0 %v131
    %v330 = vpop.f32.mrb[0].mxu0
    %v331 = vadd.f32 0.0, %v330
    %v332 = vpop.f32.mrb[0].mxu0
    %333 = vmatprep.mubr.f32.mxu0 0.0
    %334 = vmatmul.mubr.f32.gmra.mrb[0].mxu0 %v134
    %v335 = vpop.f32.mrb[0].mxu0
    %v336 = vadd.f32 0.0, %v335
    %v337 = vpop.f32.mrb[0].mxu0
    %338 = vmatprep.mubr.f32.mxu0 0.0
    %339 = vmatmul.mubr.f32.gmra.mrb[0].mxu0 %v137
    %v340 = vpop.f32.mrb[0].mxu0
    %v341 = vadd.f32 0.0, %v340
    %v342 = vpop.f32.mrb[0].mxu0
    %343 = vmatprep.mubr.f32.mxu0 0.0
    %344 = vmatmul.mubr.f32.gmra.mrb[0].mxu0 %v140
    %v345 = vpop.f32.mrb[0].mxu0
    %v346 = vadd.f32 0.0, %v345
    %v347 = vpop.f32.mrb[0].mxu0
    %348 = vmatprep.mubr.f32.mxu0 0.0
    %349 = vmatmul.mubr.f32.gmra.mrb[0].mxu0 %v143
    %v350 = vpop.f32.mrb[0].mxu0
    %v351 = vadd.f32 0.0, %v350
    %v352 = vpop.f32.mrb[0].mxu0
    %353 = vmatprep.mubr.f32.mxu0 0.0
    %354 = vmatmul.mubr.f32.gmra.mrb[0].mxu0 %v146
    %v355 = vpop.f32.mrb[0].mxu0
    %v356 = vadd.f32 0.0, %v355
    %v357 = vpop.f32.mrb[0].mxu0
    %358 = vmatprep.mubr.f32.mxu0 0.0
    %359 = vmatmul.mubr.f32.gmra.mrb[0].mxu0 %v149
    %v360 = vpop.f32.mrb[0].mxu0
    %v361 = vadd.f32 0.0, %v360
    %v362 = vpop.f32.mrb[0].mxu0
    %363 = vmatprep.mubr.f32.mxu0 0.0
    %364 = vmatmul.mubr.f32.gmra.mrb[0].mxu0 %v152
    %v365 = vpop.f32.mrb[0].mxu0
    %v366 = vadd.f32 0.0, %v365
    %v367 = vpop.f32.mrb[0].mxu0
    %368 = vmatprep.mubr.f32.mxu0 0.0
    %369 = vmatmul.mubr.f32.gmra.mrb[0].mxu0 %v155
    %v370 = vpop.f32.mrb[0].mxu0
    %v371 = vadd.f32 0.0, %v370
    %v372 = vpop.f32.mrb[0].mxu0
    %373 = vmatprep.mubr.f32.mxu0 0.0
    %374 = vmatmul.mubr.f32.gmra.mrb[0].mxu0 %v158
    %v375 = vpop.f32.mrb[0].mxu0
    %v376 = vadd.f32 0.0, %v375
    %v377 = vpop.f32.mrb[0].mxu0
    %378 = vmatprep.mubr.f32.mxu0 0.0
    %379 = vmatmul.mubr.f32.gmra.mrb[0].mxu0 %v161
    %v380 = vpop.f32.mrb[0].mxu0
    %v381 = vadd.f32 0.0, %v380
    %v382 = vpop.f32.mrb[0].mxu0
    %383 = vmatprep.mubr.f32.mxu0 0.0
    %384 = vmatmul.mubr.f32.gmra.mrb[0].mxu0 %v164
    %v385 = vpop.f32.mrb[0].mxu0
    %v386 = vadd.f32 0.0, %v385
    %v387 = vpop.f32.mrb[0].mxu0
    %388 = vmatprep.mubr.f32.mxu0 0.0
    %389 = vmatmul.mubr.f32.gmra.mrb[0].mxu0 %v167
    %v390 = vpop.f32.mrb[0].mxu0
    %v391 = vadd.f32 0.0, %v390
    %v392 = vpop.f32.mrb[0].mxu0
    %393 = vdwg.mxu0
    %v394 = vld [vmem:[#allocation2] sm:$0xff]
    %v395 = vld [vmem:[#allocation2 + $0x8] sm:$0xff]
    %v396 = vld [vmem:[#allocation2 + $0x10] sm:$0xff]
    %v397 = vld [vmem:[#allocation2 + $0x18] sm:$0xff]
    %v398 = vld [vmem:[#allocation2 + $0x20] sm:$0xff]
    %v399 = vld [vmem:[#allocation2 + $0x28] sm:$0xff]
    %v400 = vld [vmem:[#allocation2 + $0x30] sm:$0xff]
    %v401 = vld [vmem:[#allocation2 + $0x38] sm:$0xff]
    %v402 = vld [vmem:[#allocation2 + $0x40] sm:$0xff]
    %v403 = vld [vmem:[#allocation2 + $0x48] sm:$0xff]
    %v404 = vld [vmem:[#allocation2 + $0x50] sm:$0xff]
    %v405 = vld [vmem:[#allocation2 + $0x58] sm:$0xff]
    %v406 = vld [vmem:[#allocation2 + $0x60] sm:$0xff]
    %v407 = vld [vmem:[#allocation2 + $0x68] sm:$0xff]
    %v408 = vld [vmem:[#allocation2 + $0x70] sm:$0xff]
    %v409 = vld [vmem:[#allocation2 + $0x78] sm:$0xff]
    %v410 = vld [vmem:[#allocation2 + $0x80] sm:$0xff]
    %v411 = vld [vmem:[#allocation2 + $0x88] sm:$0xff]
    %v412 = vld [vmem:[#allocation2 + $0x90] sm:$0xff]
    %v413 = vld [vmem:[#allocation2 + $0x98] sm:$0xff]
    %v414 = vld [vmem:[#allocation2 + $0xa0] sm:$0xff]
    %v415 = vld [vmem:[#allocation2 + $0xa8] sm:$0xff]
    %v416 = vld [vmem:[#allocation2 + $0xb0] sm:$0xff]
    %v417 = vld [vmem:[#allocation2 + $0xb8] sm:$0xff]
    %v418 = vld [vmem:[#allocation2 + $0xc0] sm:$0xff]
    %v419 = vld [vmem:[#allocation2 + $0xc8] sm:$0xff]
    %v420 = vld [vmem:[#allocation2 + $0xd0] sm:$0xff]
    %v421 = vld [vmem:[#allocation2 + $0xd8] sm:$0xff]
    %v422 = vld [vmem:[#allocation2 + $0xe0] sm:$0xff]
    %v423 = vld [vmem:[#allocation2 + $0xe8] sm:$0xff]
    %v424 = vld [vmem:[#allocation2 + $0xf0] sm:$0xff]
    %v425 = vld [vmem:[#allocation2 + $0xf8] sm:$0xff]
    %v426 = vld [vmem:[#allocation2 + $0x100] sm:$0xff]
    %v427 = vld [vmem:[#allocation2 + $0x108] sm:$0xff]
    %v428 = vld [vmem:[#allocation2 + $0x110] sm:$0xff]
    %v429 = vld [vmem:[#allocation2 + $0x118] sm:$0xff]
    %v430 = vld [vmem:[#allocation2 + $0x120] sm:$0xff]
    %v431 = vld [vmem:[#allocation2 + $0x128] sm:$0xff]
    %v432 = vld [vmem:[#allocation2 + $0x130] sm:$0xff]
    %v433 = vld [vmem:[#allocation2 + $0x138] sm:$0xff]
    %v434 = vld [vmem:[#allocation2 + $0x140] sm:$0xff]
    %v435 = vld [vmem:[#allocation2 + $0x148] sm:$0xff]
    %v436 = vld [vmem:[#allocation2 + $0x150] sm:$0xff]
    %v437 = vld [vmem:[#allocation2 + $0x158] sm:$0xff]
    %v438 = vld [vmem:[#allocation2 + $0x160] sm:$0xff]
    %v439 = vld [vmem:[#allocation2 + $0x168] sm:$0xff]
    %v440 = vld [vmem:[#allocation2 + $0x170] sm:$0xff]
    %v441 = vld [vmem:[#allocation2 + $0x178] sm:$0xff]
    %v442 = vld [vmem:[#allocation2 + $0x180] sm:$0xff]
    %v443 = vld [vmem:[#allocation2 + $0x188] sm:$0xff]
    %v444 = vld [vmem:[#allocation2 + $0x190] sm:$0xff]
    %v445 = vld [vmem:[#allocation2 + $0x198] sm:$0xff]
    %v446 = vld [vmem:[#allocation2 + $0x1a0] sm:$0xff]
    %v447 = vld [vmem:[#allocation2 + $0x1a8] sm:$0xff]
    %v448 = vld [vmem:[#allocation2 + $0x1b0] sm:$0xff]
    %v449 = vld [vmem:[#allocation2 + $0x1b8] sm:$0xff]
    %v450 = vld [vmem:[#allocation2 + $0x1c0] sm:$0xff]
    %v451 = vld [vmem:[#allocation2 + $0x1c8] sm:$0xff]
    %v452 = vld [vmem:[#allocation2 + $0x1d0] sm:$0xff]
    %v453 = vld [vmem:[#allocation2 + $0x1d8] sm:$0xff]
    %v454 = vld [vmem:[#allocation2 + $0x1e0] sm:$0xff]
    %v455 = vld [vmem:[#allocation2 + $0x1e8] sm:$0xff]
    %v456 = vld [vmem:[#allocation2 + $0x1f0] sm:$0xff]
    %v457 = vld [vmem:[#allocation2 + $0x1f8] sm:$0xff]
    %v458 = vld [vmem:[%s3] sm:$0x1]
    %v460 = vlaneseq
    %v461 = vshrl.u32 %v460, 7
    %v462 = vsub.s32 0, %v461
    %v463 = vrot.slane %v458, %v462
    %465 = vmatprep.subr.mxu0 0.0
    %466 = vmatpush1.msra.mxu0 %v236
    %467 = vmatprep.subr.mxu0 0.0
    %468 = vmatpush1.msra.mxu0 %v241
    %469 = vmatprep.subr.mxu0 0.0
    %470 = vmatpush1.msra.mxu0 %v246
    %471 = vmatprep.subr.mxu0 0.0
    %472 = vmatpush1.msra.mxu0 %v251
    %473 = vmatprep.subr.mxu0 0.0
    %474 = vmatpush1.msra.mxu0 %v256
    %475 = vmatprep.subr.mxu0 0.0
    %476 = vmatpush1.msra.mxu0 %v261
    %477 = vmatprep.subr.mxu0 0.0
    %478 = vmatpush1.msra.mxu0 %v266
    %479 = vmatprep.subr.mxu0 0.0
    %480 = vmatpush1.msra.mxu0 %v271
    %481 = vmatprep.subr.mxu0 0.0
    %482 = vmatpush1.msra.mxu0 %v276
    %483 = vmatprep.subr.mxu0 0.0
    %484 = vmatpush1.msra.mxu0 %v281
    %485 = vmatprep.subr.mxu0 0.0
    %486 = vmatpush1.msra.mxu0 %v286
    %487 = vmatprep.subr.mxu0 0.0
    %488 = vmatpush1.msra.mxu0 %v291
    %489 = vmatprep.subr.mxu0 0.0
    %490 = vmatpush1.msra.mxu0 %v296
    %491 = vmatprep.subr.mxu0 0.0
    %492 = vmatpush1.msra.mxu0 %v301
    %493 = vmatprep.subr.mxu0 0.0
    %494 = vmatpush1.msra.mxu0 %v306
    %495 = vmatprep.subr.mxu0 0.0
    %496 = vmatpush1.msra.mxu0 %v311
    %497 = vmatprep.subr.mxu0 0.0
    %498 = vmatpush1.msra.mxu0 %v316
    %499 = vmatprep.subr.mxu0 0.0
    %500 = vmatpush1.msra.mxu0 %v321
    %501 = vmatprep.subr.mxu0 0.0
    %502 = vmatpush1.msra.mxu0 %v326
    %503 = vmatprep.subr.mxu0 0.0
    %504 = vmatpush1.msra.mxu0 %v331
    %505 = vmatprep.subr.mxu0 0.0
    %506 = vmatpush1.msra.mxu0 %v336
    %507 = vmatprep.subr.mxu0 0.0
    %508 = vmatpush1.msra.mxu0 %v341
    %509 = vmatprep.subr.mxu0 0.0
    %510 = vmatpush1.msra.mxu0 %v346
    %511 = vmatprep.subr.mxu0 0.0
    %512 = vmatpush1.msra.mxu0 %v351
    %513 = vmatprep.subr.mxu0 0.0
    %514 = vmatpush1.msra.mxu0 %v356
    %515 = vmatprep.subr.mxu0 0.0
    %516 = vmatpush1.msra.mxu0 %v361
    %517 = vmatprep.subr.mxu0 0.0
    %518 = vmatpush1.msra.mxu0 %v366
    %519 = vmatprep.subr.mxu0 0.0
    %520 = vmatpush1.msra.mxu0 %v371
    %521 = vmatprep.subr.mxu0 0.0
    %522 = vmatpush1.msra.mxu0 %v376
    %523 = vmatprep.subr.mxu0 0.0
    %524 = vmatpush1.msra.mxu0 %v381
    %525 = vmatprep.subr.mxu0 0.0
    %526 = vmatpush1.msra.mxu0 %v386
    %527 = vmatprep.subr.mxu0 0.0
    %528 = vmatpush1.msra.mxu0 %v391
    %529 = vmatprep.mubr.f32.mxu0 %v395
    %530 = vmatmul.mubr.f32.gmra.mrb[0].mxu0 %v394
    %v531 = vpop.f32.mrb[0].mxu0
    %v532 = vadd.f32 %v463, %v531
    %v533 = vpop.f32.mrb[0].mxu0
    %534 = vmatprep.mubr.f32.mxu0 %v397
    %535 = vmatmul.mubr.f32.gmra.mrb[0].mxu0 %v396
    %v536 = vpop.f32.mrb[0].mxu0
    %v537 = vadd.f32 %v463, %v536
    %v538 = vpop.f32.mrb[0].mxu0
    %539 = vmatprep.mubr.f32.mxu0 %v399
    %540 = vmatmul.mubr.f32.gmra.mrb[0].mxu0 %v398
    %v541 = vpop.f32.mrb[0].mxu0
    %v542 = vadd.f32 %v463, %v541
    %v543 = vpop.f32.mrb[0].mxu0
    %544 = vmatprep.mubr.f32.mxu0 %v401
    %545 = vmatmul.mubr.f32.gmra.mrb[0].mxu0 %v400
    %v546 = vpop.f32.mrb[0].mxu0
    %v547 = vadd.f32 %v463, %v546
    %v548 = vpop.f32.mrb[0].mxu0
    %549 = vmatprep.mubr.f32.mxu0 %v403
    %550 = vmatmul.mubr.f32.gmra.mrb[0].mxu0 %v402
    %v551 = vpop.f32.mrb[0].mxu0
    %v552 = vadd.f32 %v463, %v551
    %v553 = vpop.f32.mrb[0].mxu0
    %554 = vmatprep.mubr.f32.mxu0 %v405
    %555 = vmatmul.mubr.f32.gmra.mrb[0].mxu0 %v404
    %v556 = vpop.f32.mrb[0].mxu0
    %v557 = vadd.f32 %v463, %v556
    %v558 = vpop.f32.mrb[0].mxu0
    %559 = vmatprep.mubr.f32.mxu0 %v407
    %560 = vmatmul.mubr.f32.gmra.mrb[0].mxu0 %v406
    %v561 = vpop.f32.mrb[0].mxu0
    %v562 = vadd.f32 %v463, %v561
    %v563 = vpop.f32.mrb[0].mxu0
    %564 = vmatprep.mubr.f32.mxu0 %v409
    %565 = vmatmul.mubr.f32.gmra.mrb[0].mxu0 %v408
    %v566 = vpop.f32.mrb[0].mxu0
    %v567 = vadd.f32 %v463, %v566
    %v568 = vpop.f32.mrb[0].mxu0
    %569 = vmatprep.mubr.f32.mxu0 %v411
    %570 = vmatmul.mubr.f32.gmra.mrb[0].mxu0 %v410
    %v571 = vpop.f32.mrb[0].mxu0
    %v572 = vadd.f32 %v463, %v571
    %v573 = vpop.f32.mrb[0].mxu0
    %574 = vmatprep.mubr.f32.mxu0 %v413
    %575 = vmatmul.mubr.f32.gmra.mrb[0].mxu0 %v412
    %v576 = vpop.f32.mrb[0].mxu0
    %v577 = vadd.f32 %v463, %v576
    %v578 = vpop.f32.mrb[0].mxu0
    %579 = vmatprep.mubr.f32.mxu0 %v415
    %580 = vmatmul.mubr.f32.gmra.mrb[0].mxu0 %v414
    %v581 = vpop.f32.mrb[0].mxu0
    %v582 = vadd.f32 %v463, %v581
    %v583 = vpop.f32.mrb[0].mxu0
    %584 = vmatprep.mubr.f32.mxu0 %v417
    %585 = vmatmul.mubr.f32.gmra.mrb[0].mxu0 %v416
    %v586 = vpop.f32.mrb[0].mxu0
    %v587 = vadd.f32 %v463, %v586
    %v588 = vpop.f32.mrb[0].mxu0
    %589 = vmatprep.mubr.f32.mxu0 %v419
    %590 = vmatmul.mubr.f32.gmra.mrb[0].mxu0 %v418
    %v591 = vpop.f32.mrb[0].mxu0
    %v592 = vadd.f32 %v463, %v591
    %v593 = vpop.f32.mrb[0].mxu0
    %594 = vmatprep.mubr.f32.mxu0 %v421
    %595 = vmatmul.mubr.f32.gmra.mrb[0].mxu0 %v420
    %v596 = vpop.f32.mrb[0].mxu0
    %v597 = vadd.f32 %v463, %v596
    %v598 = vpop.f32.mrb[0].mxu0
    %599 = vmatprep.mubr.f32.mxu0 %v423
    %600 = vmatmul.mubr.f32.gmra.mrb[0].mxu0 %v422
    %v601 = vpop.f32.mrb[0].mxu0
    %v602 = vadd.f32 %v463, %v601
    %v603 = vpop.f32.mrb[0].mxu0
    %604 = vmatprep.mubr.f32.mxu0 %v425
    %605 = vmatmul.mubr.f32.gmra.mrb[0].mxu0 %v424
    %v606 = vpop.f32.mrb[0].mxu0
    %v607 = vadd.f32 %v463, %v606
    %v608 = vpop.f32.mrb[0].mxu0
    %609 = vmatprep.mubr.f32.mxu0 %v427
    %610 = vmatmul.mubr.f32.gmra.mrb[0].mxu0 %v426
    %v611 = vpop.f32.mrb[0].mxu0
    %v612 = vadd.f32 %v463, %v611
    %v613 = vpop.f32.mrb[0].mxu0
    %614 = vmatprep.mubr.f32.mxu0 %v429
    %615 = vmatmul.mubr.f32.gmra.mrb[0].mxu0 %v428
    %v616 = vpop.f32.mrb[0].mxu0
    %v617 = vadd.f32 %v463, %v616
    %v618 = vpop.f32.mrb[0].mxu0
    %619 = vmatprep.mubr.f32.mxu0 %v431
    %620 = vmatmul.mubr.f32.gmra.mrb[0].mxu0 %v430
    %v621 = vpop.f32.mrb[0].mxu0
    %v622 = vadd.f32 %v463, %v621
    %v623 = vpop.f32.mrb[0].mxu0
    %624 = vmatprep.mubr.f32.mxu0 %v433
    %625 = vmatmul.mubr.f32.gmra.mrb[0].mxu0 %v432
    %v626 = vpop.f32.mrb[0].mxu0
    %v627 = vadd.f32 %v463, %v626
    %v628 = vpop.f32.mrb[0].mxu0
    %629 = vmatprep.mubr.f32.mxu0 %v435
    %630 = vmatmul.mubr.f32.gmra.mrb[0].mxu0 %v434
    %v631 = vpop.f32.mrb[0].mxu0
    %v632 = vadd.f32 %v463, %v631
    %v633 = vpop.f32.mrb[0].mxu0
    %634 = vmatprep.mubr.f32.mxu0 %v437
    %635 = vmatmul.mubr.f32.gmra.mrb[0].mxu0 %v436
    %v636 = vpop.f32.mrb[0].mxu0
    %v637 = vadd.f32 %v463, %v636
    %v638 = vpop.f32.mrb[0].mxu0
    %639 = vmatprep.mubr.f32.mxu0 %v439
    %640 = vmatmul.mubr.f32.gmra.mrb[0].mxu0 %v438
    %v641 = vpop.f32.mrb[0].mxu0
    %v642 = vadd.f32 %v463, %v641
    %v643 = vpop.f32.mrb[0].mxu0
    %644 = vmatprep.mubr.f32.mxu0 %v441
    %645 = vmatmul.mubr.f32.gmra.mrb[0].mxu0 %v440
    %v646 = vpop.f32.mrb[0].mxu0
    %v647 = vadd.f32 %v463, %v646
    %v648 = vpop.f32.mrb[0].mxu0
    %649 = vmatprep.mubr.f32.mxu0 %v443
    %650 = vmatmul.mubr.f32.gmra.mrb[0].mxu0 %v442
    %v651 = vpop.f32.mrb[0].mxu0
    %v652 = vadd.f32 %v463, %v651
    %v653 = vpop.f32.mrb[0].mxu0
    %654 = vmatprep.mubr.f32.mxu0 %v445
    %655 = vmatmul.mubr.f32.gmra.mrb[0].mxu0 %v444
    %v656 = vpop.f32.mrb[0].mxu0
    %v657 = vadd.f32 %v463, %v656
    %v658 = vpop.f32.mrb[0].mxu0
    %659 = vmatprep.mubr.f32.mxu0 %v447
    %660 = vmatmul.mubr.f32.gmra.mrb[0].mxu0 %v446
    %v661 = vpop.f32.mrb[0].mxu0
    %v662 = vadd.f32 %v463, %v661
    %v663 = vpop.f32.mrb[0].mxu0
    %664 = vmatprep.mubr.f32.mxu0 %v449
    %665 = vmatmul.mubr.f32.gmra.mrb[0].mxu0 %v448
    %v666 = vpop.f32.mrb[0].mxu0
    %v667 = vadd.f32 %v463, %v666
    %v668 = vpop.f32.mrb[0].mxu0
    %669 = vmatprep.mubr.f32.mxu0 %v451
    %670 = vmatmul.mubr.f32.gmra.mrb[0].mxu0 %v450
    %v671 = vpop.f32.mrb[0].mxu0
    %v672 = vadd.f32 %v463, %v671
    %v673 = vpop.f32.mrb[0].mxu0
    %674 = vmatprep.mubr.f32.mxu0 %v453
    %675 = vmatmul.mubr.f32.gmra.mrb[0].mxu0 %v452
    %v676 = vpop.f32.mrb[0].mxu0
    %v677 = vadd.f32 %v463, %v676
    %v678 = vpop.f32.mrb[0].mxu0
    %679 = vmatprep.mubr.f32.mxu0 %v455
    %680 = vmatmul.mubr.f32.gmra.mrb[0].mxu0 %v454
    %v681 = vpop.f32.mrb[0].mxu0
    %v682 = vadd.f32 %v463, %v681
    %v683 = vpop.f32.mrb[0].mxu0
    %684 = vmatprep.mubr.f32.mxu0 %v457
    %685 = vmatmul.mubr.f32.gmra.mrb[0].mxu0 %v456
    %v686 = vpop.f32.mrb[0].mxu0
    %v687 = vadd.f32 %v463, %v686
    %v688 = vpop.f32.mrb[0].mxu0
    %689 = vdwg.mxu0
    %690 = vst [vmem:[#allocation5] sm:$0xff] %v532
    %691 = vst [vmem:[#allocation5 + $0x8] sm:$0xff] %v537
    %692 = vst [vmem:[#allocation5 + $0x10] sm:$0xff] %v542
    %693 = vst [vmem:[#allocation5 + $0x18] sm:$0xff] %v547
    %694 = vst [vmem:[#allocation5 + $0x20] sm:$0xff] %v552
    %695 = vst [vmem:[#allocation5 + $0x28] sm:$0xff] %v557
    %696 = vst [vmem:[#allocation5 + $0x30] sm:$0xff] %v562
    %697 = vst [vmem:[#allocation5 + $0x38] sm:$0xff] %v567
    %698 = vst [vmem:[#allocation5 + $0x40] sm:$0xff] %v572
    %699 = vst [vmem:[#allocation5 + $0x48] sm:$0xff] %v577
    %700 = vst [vmem:[#allocation5 + $0x50] sm:$0xff] %v582
    %701 = vst [vmem:[#allocation5 + $0x58] sm:$0xff] %v587
    %702 = vst [vmem:[#allocation5 + $0x60] sm:$0xff] %v592
    %703 = vst [vmem:[#allocation5 + $0x68] sm:$0xff] %v597
    %704 = vst [vmem:[#allocation5 + $0x70] sm:$0xff] %v602
    %705 = vst [vmem:[#allocation5 + $0x78] sm:$0xff] %v607
    %706 = vst [vmem:[#allocation5 + $0x80] sm:$0xff] %v612
    %707 = vst [vmem:[#allocation5 + $0x88] sm:$0xff] %v617
    %708 = vst [vmem:[#allocation5 + $0x90] sm:$0xff] %v622
    %709 = vst [vmem:[#allocation5 + $0x98] sm:$0xff] %v627
    %710 = vst [vmem:[#allocation5 + $0xa0] sm:$0xff] %v632
    %711 = vst [vmem:[#allocation5 + $0xa8] sm:$0xff] %v637
    %712 = vst [vmem:[#allocation5 + $0xb0] sm:$0xff] %v642
    %713 = vst [vmem:[#allocation5 + $0xb8] sm:$0xff] %v647
    %714 = vst [vmem:[#allocation5 + $0xc0] sm:$0xff] %v652
    %715 = vst [vmem:[#allocation5 + $0xc8] sm:$0xff] %v657
    %716 = vst [vmem:[#allocation5 + $0xd0] sm:$0xff] %v662
    %717 = vst [vmem:[#allocation5 + $0xd8] sm:$0xff] %v667
    %718 = vst [vmem:[#allocation5 + $0xe0] sm:$0xff] %v672
    %719 = vst [vmem:[#allocation5 + $0xe8] sm:$0xff] %v677
    %720 = vst [vmem:[#allocation5 + $0xf0] sm:$0xff] %v682
    %721 = vst [vmem:[#allocation5 + $0xf8] sm:$0xff] %v687
    // Predicated region
    $region22: #{tpu_custom_call.1} parent=1 // pred_check
      _
    $region23: #{tpu_custom_call.1} parent=1 // pred_check_branch
      %723 = sbr.rel (0) target = $region25
    $region24: #{tpu_custom_call.1} parent=1 // pred_region
      %s725 = ssub.s32 4096, 4096
      %726 = vsyncadd [#allocation4], %s725
      %s727 = sshll.u32 [#allocation5], 4
      %s728 = int_to_ptr.vmem [resolvable:$true] %s727
      %733 = dma.vmem_to_hbm [thread:$0]  %s728, 4096, %s4, [#allocation4], 128, 128, 8
    $region25: #{tpu_custom_call.1} parent=1 // pred_fallthru
      _
    // Predicated region
    $region26: #{tpu_custom_call.1} parent=1 // pred_check
      _
    $region27: #{tpu_custom_call.1} parent=1 // pred_check_branch
      %735 = sbr.rel (0) target = $region29
    $region28: #{tpu_custom_call.1} parent=1 // pred_region
      %736 = dma.done [#allocation4], 4096
    $region29: #{tpu_custom_call.1} parent=1 // pred_fallthru
      _
    %737 = vsyncpa [#allocation3], 1
    %738 = vsyncpa [#allocation4], 1

</llo_original>
